<compile_context>
chip_gen: v7x
topology: tpu7x:2x2x1
jax: 0.10.0
libtpu: 0.0.40
codegen_flags: <defaults>
</compile_context>

<pallas_src>
import jax
import jax.numpy as jnp
from jax.experimental import pallas as pl
from jax.experimental.pallas import tpu as pltpu

# --- compression config (default_compression_config) ---
NUM_BITS = 8
GROUP_SIZE = 256
GROUP_DIM = 1
SYMMETRIC = True

_VMEM_BUDGET = 40 * 1024 * 1024     # keeps tiles comfortable on v7x (64 MiB/TC)


def compress(weight):
    """Group-wise symmetric int8 quantization along dim 1 (CLinear.__init__).

    Returns a kernel-friendly packed tuple:
      q_kmajor  : (K_pad, N) int8    -- K-major quantized weight
      scale     : (N, G, 1)  float32 -- 127 / max|w| per group (torch layout)
      inv_scale : (G, N)     float32 -- 1/scale, lane-dense
      (N, K)    : original shape
    """
    N, K = weight.shape
    G = (K + GROUP_SIZE - 1) // GROUP_SIZE
    K_pad = G * GROUP_SIZE

    w = weight.astype(jnp.float32)
    if K_pad != K:
        w = jnp.pad(w, ((0, 0), (0, K_pad - K)))
    data = w.reshape(N, G, GROUP_SIZE)

    B = 2 ** (NUM_BITS - 1) - 1  # 127
    amax = jnp.max(jnp.abs(data), axis=2, keepdims=True)             # (N, G, 1)
    # Guard all-zero groups (zero rows / all-padding tail groups) so the scale
    # stays finite and the dequantized weight is exactly 0, not NaN.
    scale = B / jnp.maximum(amax, 1e-30)
    q = jnp.round(jnp.clip(data * scale, -B, B)).astype(jnp.int8)    # (N, G, GS)

    q_kmajor = jnp.transpose(q, (1, 2, 0)).reshape(K_pad, N)         # (K_pad, N)
    inv_scale = jnp.transpose((1.0 / scale)[:, :, 0], (1, 0))        # (G, N)
    return (q_kmajor, scale.astype(jnp.float32),
            inv_scale.astype(jnp.float32), (N, K))


# ---------------------- Pallas kernel -------------------------------------

def _make_clinear_kernel(groups_per_block, group_size):
    """Kernel factory: `groups_per_block` 256-deep bf16 sub-dots per grid step."""

    def kernel(x_ref, wq_ref, isc_ref, bias_ref, o_ref):
        # x_ref   : (tm, kblk)       bf16
        # wq_ref  : (kblk, tn)       int8   (K-major weight slab)
        # isc_ref : (1, gpb, tn)     f32    (reciprocal group scales)
        # bias_ref: (1, tn)          f32
        # o_ref   : (tm, tn)         f32    (resident accumulator across K)
        k = pl.program_id(2)

        @pl.when(k == 0)
        def _init():
            o_ref[...] = jnp.broadcast_to(bias_ref[...], o_ref.shape)

        isc = isc_ref[0]                               # (gpb, tn)
        acc = jnp.zeros(o_ref.shape, jnp.float32)
        for gg in range(groups_per_block):             # static unroll
            lo = gg * group_size
            # int8 -> bf16 cast is exact; bf16 x bf16 -> f32 runs at native
            # MXU rate.  The group-constant reciprocal scale is applied to the
            # (tm, tn) partial product, not per weight element.
            part = jnp.dot(
                x_ref[:, lo:lo + group_size],
                wq_ref[lo:lo + group_size, :].astype(jnp.bfloat16),
                preferred_element_type=jnp.float32,
            )                                          # (tm, tn)
            acc = acc + part * isc[gg:gg + 1, :]       # (1, tn) bcast along M
        o_ref[...] += acc

    return kernel


# ---------------------- tile selection helpers ------------------------------

def _pick_tm(M):
    # Block 2nd-to-last dim must be a multiple of 8 or equal the full dim.
    return M if M <= 256 else 256


def _pick_gpb(G):
    # Groups per K step (kblk = gpb*256, up to 2048-deep).  Widened divisor
    # search so awkward group counts still get deep K blocks.
    if G <= 8:
        return G
    for g in (8, 6, 4, 3, 2):
        if G % g == 0:
            return g
    return 1  # TODO(synk): support a ragged last K step instead of kblk=256 here.


def _pick_tn(N, m_blocks):
    if N % 128 != 0:
        return N  # full-dim block (masked partial lanes); unusual N only
    if N <= 2048:
        tn = N
    else:
        tn = next(t for t in (2048, 1024, 512, 256, 128) if N % t == 0)
    # v7x megacore: keep >= 2 blocks on at least one "parallel" axis so both
    # TensorCores get work when M fits in a single tile.
    if m_blocks == 1 and N // tn < 2:
        for t in (1024, 512, 256, 128):
            if N % t == 0 and N // t >= 2:
                tn = t
                break
    return tn


def _vmem_estimate(tm, tn, kblk, gpb, w_bufs):
    return (2 * tm * kblk * 2            # bf16 x block, double-buffered
            + w_bufs * kblk * tn         # int8 weight slab
            + 2 * gpb * tn * 4           # reciprocal scales
            + 2 * tn * 4                 # bias
            + tm * tn * 4)               # resident f32 output/accumulator


# ---------------------- forward wrapper -------------------------------------

def clinear_forward(x, packed_weight, bias=None):
    """Forward pass of CLinear. x: (..., in_features)."""
    wq_km, _scale, inv_scale, (N, K) = packed_weight
    K_pad = wq_km.shape[0]
    G = K_pad // GROUP_SIZE

    lead_shape = x.shape[:-1]
    M = 1
    for d in lead_shape:
        M *= d

    # bf16 activations: int8 dequant error dominates, traffic is halved, and
    # the MXU stays on its native bf16 path on all generations.
    x2 = x.reshape(M, K).astype(jnp.bfloat16)
    if K_pad != K:
        # Padded weight columns dequantize to exactly 0 (guarded scale), so
        # zero-padding x is exact and avoids NaN*0 from unmasked tail reads.
        x2 = jnp.pad(x2, ((0, 0), (0, K_pad - K)))

    tm = _pick_tm(M)
    m_blocks = pl.cdiv(M, tm)          # no wrapper-side M pad: boundary masking
    gpb = _pick_gpb(G)
    kblk = gpb * GROUP_SIZE
    tn = _pick_tn(N, m_blocks)
    k_steps = G // gpb
    w_bufs = 3 if k_steps >= 3 else 2  # deeper weight buffering only if useful

    # Shrink the N tile if the estimate ever exceeds the v7x-safe VMEM budget.
    while (_vmem_estimate(tm, tn, kblk, gpb, w_bufs) > _VMEM_BUDGET
           and tn % 256 == 0):
        tn //= 2

    if bias is None:
        bias2 = jnp.zeros((1, N), jnp.float32)
    else:
        bias2 = bias.reshape(1, N).astype(jnp.float32)

    # (K_steps, gpb, N): lane-dense scales, no size-1 sublane padding per group.
    isc3 = inv_scale.reshape(k_steps, gpb, N)

    grid = (m_blocks, pl.cdiv(N, tn), k_steps)

    def run(deep_weight_buffering):
        if deep_weight_buffering and hasattr(pl, "Buffered"):
            w_spec = pl.BlockSpec((kblk, tn), lambda i, j, k: (k, j),
                                  pipeline_mode=pl.Buffered(3))
        else:
            w_spec = pl.BlockSpec((kblk, tn), lambda i, j, k: (k, j))
        return pl.pallas_call(
            _make_clinear_kernel(gpb, GROUP_SIZE),
            out_shape=jax.ShapeDtypeStruct((M, N), jnp.float32),
            grid_spec=pltpu.PrefetchScalarGridSpec(
                num_scalar_prefetch=0,
                grid=grid,
                in_specs=[
                    pl.BlockSpec((tm, kblk), lambda i, j, k: (i, k)),       # x
                    w_spec,                                                 # int8 W
                    pl.BlockSpec((1, gpb, tn), lambda i, j, k: (k, 0, j)),  # 1/scale
                    pl.BlockSpec((1, tn), lambda i, j, k: (0, j)),          # bias
                ],
                out_specs=pl.BlockSpec((tm, tn), lambda i, j, k: (i, j)),
            ),
            compiler_params=pltpu.CompilerParams(
                dimension_semantics=("parallel", "parallel", "arbitrary"),
                vmem_limit_bytes=48 * 1024 * 1024,  # fits v7x (64 MiB) and below
            ),
        )(x2, wq_km, isc3, bias2)

    if w_bufs == 3:
        try:
            out = run(True)
        except Exception:
            # Fallback if pipeline_mode=pl.Buffered is unavailable in this jax.
            out = run(False)
    else:
        out = run(False)

    return out.reshape(*lead_shape, N)


# ---------------------- reference (plain JAX) ------------------------------

def clinear_reference(x, packed_weight, bias=None):
    """Mirrors decompress() + F.linear: W = q / scale ; y = x @ W.T + b."""
    wq_km, scale, _inv, (N, K) = packed_weight
    K_pad = wq_km.shape[0]
    G = K_pad // GROUP_SIZE
    q = jnp.transpose(wq_km.reshape(G, GROUP_SIZE, N), (2, 0, 1))   # (N, G, GS)
    w = q.astype(jnp.float32) / scale                               # dequant
    w = w.reshape(N, K_pad)[:, :K]
    y = x.astype(jnp.float32) @ w.T
    if bias is not None:
        y = y + bias.astype(jnp.float32)
    return y


if __name__ == "__main__":
    key = jax.random.PRNGKey(0)
    k_w, k_b, k_x, k_w2, k_x2 = jax.random.split(key, 5)

    # --- primary small-shape check ------------------------------------------
    in_features = 1536    # 6 quantization groups -> single 1536-deep K step
    out_features = 384    # 3 lane groups
    batch = (2, 4)        # flattened to M = 8

    weight = jax.random.normal(k_w, (out_features, in_features), jnp.float32)
    bias = jax.random.normal(k_b, (out_features,), jnp.float32)
    x = jax.random.normal(k_x, (*batch, in_features), jnp.float32)

    packed = compress(weight)                     # simulate CLinear.__init__
    y = clinear_forward(x, packed, bias)          # Pallas kernel forward
    y = jax.block_until_ready(y)

    y_ref = clinear_reference(x.reshape(-1, in_features), packed, bias)
    y_ref = y_ref.reshape(*batch, out_features)
    assert y.shape == (*batch, out_features)
    err = float(jnp.max(jnp.abs(y - y_ref)) / (jnp.max(jnp.abs(y_ref)) + 1e-9))
    assert err < 2e-2, f"primary check: rel-max err {err:.3e}"

    # --- secondary check: multi-K-step accumulation + partial M boundary -----
    in2, out2, m2 = 6144, 384, 300                # G=24 -> 3 K steps; ragged M
    weight2 = jax.random.normal(k_w2, (out2, in2), jnp.float32) * 0.05
    x_big = jax.random.normal(k_x2, (m2, in2), jnp.float32)
    packed2 = compress(weight2)
    y2 = jax.block_until_ready(clinear_forward(x_big, packed2, None))
    y2_ref = clinear_reference(x_big, packed2, None)
    assert y2.shape == (m2, out2)
    err2 = float(jnp.max(jnp.abs(y2 - y2_ref)) /
                 (jnp.max(jnp.abs(y2_ref)) + 1e-9))
    assert err2 < 2e-2, f"secondary check: rel-max err {err2:.3e}"

    print("KERNEL_OK")
</pallas_src>

<mosaic_0001>
module attributes {stable_mosaic.version = 11 : i64} {
  func.func @kernel(%arg0: i32, %arg1: i32, %arg2: i32, %arg3: memref<8x1536xbf16, #tpu.memory_space<vmem>>, %arg4: memref<1536x128xi8, #tpu.memory_space<vmem>>, %arg5: memref<1x6x128xf32, #tpu.memory_space<vmem>>, %arg6: memref<1x128xf32, #tpu.memory_space<vmem>>, %arg7: memref<8x128xf32, #tpu.memory_space<vmem>>) attributes {dimension_semantics = [#tpu.dimension_semantics<parallel>, #tpu.dimension_semantics<parallel>, #tpu.dimension_semantics<arbitrary>], iteration_bounds = array<i64: 1, 3, 1>, scalar_prefetch = 0 : i64, scratch_operands = 0 : i64, tpu.core_type = #tpu.core_type<tc>, window_params = [{transform_indices = @transform_0, window_bounds = array<i64: 8, 1536>}, {transform_indices = @transform_1, window_bounds = array<i64: 1536, 128>}, {transform_indices = @transform_2, window_bounds = array<i64: 1, 6, 128>}, {transform_indices = @transform_3, window_bounds = array<i64: 1, 128>}, {transform_indices = @transform_4, window_bounds = array<i64: 8, 128>}]} {
    %c0_i32 = arith.constant 0 : i32
    %0 = arith.cmpi eq, %arg2, %c0_i32 : i32
    %1 = arith.extui %0 : i1 to i32
    %c0_i32_0 = arith.constant 0 : i32
    %2 = arith.cmpi ne, %1, %c0_i32_0 : i32
    scf.if %2 {
      %c0_32 = arith.constant 0 : index
      %c0_33 = arith.constant 0 : index
      %57 = vector.load %arg6[%c0_32, %c0_33] : memref<1x128xf32, #tpu.memory_space<vmem>>, vector<1x128xf32>
      %58 = vector.shape_cast %57 : vector<1x128xf32> to vector<1x128xf32>
      %59 = vector.broadcast %58 : vector<1x128xf32> to vector<8x128xf32>
      %c0_34 = arith.constant 0 : index
      %c0_35 = arith.constant 0 : index
      %60 = vector.load %arg7[%c0_34, %c0_35] : memref<8x128xf32, #tpu.memory_space<vmem>>, vector<8x128xf32>
      tpu.vector_store %arg7[%c0_34, %c0_35], %59 {strides = array<i32>} : memref<8x128xf32, #tpu.memory_space<vmem>>, vector<8x128xf32>,
    } else {
    }
    %c0 = arith.constant 0 : index
    %c0_1 = arith.constant 0 : index
    %c0_2 = arith.constant 0 : index
    %3 = vector.load %arg5[%c0, %c0_1, %c0_2] : memref<1x6x128xf32, #tpu.memory_space<vmem>>, vector<1x6x128xf32>
    %4 = vector.shape_cast %3 : vector<1x6x128xf32> to vector<6x128xf32>
    %cst = arith.constant 0.000000e+00 : f32
    %5 = vector.broadcast %cst : f32 to vector<8x128xf32>
    %c0_3 = arith.constant 0 : index
    %c0_4 = arith.constant 0 : index
    %6 = vector.load %arg3[%c0_3, %c0_4] : memref<8x1536xbf16, #tpu.memory_space<vmem>>, vector<8x256xbf16>
    %c0_5 = arith.constant 0 : index
    %c0_6 = arith.constant 0 : index
    %7 = vector.load %arg4[%c0_5, %c0_6] : memref<1536x128xi8, #tpu.memory_space<vmem>>, vector<256x128xi8>
    %8 = arith.sitofp %7 : vector<256x128xi8> to vector<256x128xbf16>
    %cst_7 = arith.constant dense<0.000000e+00> : vector<8x128xf32>
    %9 = tpu.matmul %6, %8, %cst_7 {dimension_numbers = #tpu.dot_dimension_numbers<[1], [0], [0], [1], [0, 0, 1, 1], [], []>} : vector<8x256xbf16>, vector<256x128xbf16>, vector<8x128xf32> -> vector<8x128xf32>
    %10 = vector.extract_strided_slice %4 {offsets = [0, 0], sizes = [1, 128], strides = [1, 1]} : vector<6x128xf32> to vector<1x128xf32>
    %11 = vector.broadcast %10 : vector<1x128xf32> to vector<8x128xf32>
    %12 = arith.mulf %9, %11 : vector<8x128xf32>
    %13 = arith.addf %5, %12 : vector<8x128xf32>
    %c0_8 = arith.constant 0 : index
    %c256 = arith.constant 256 : index
    %14 = vector.load %arg3[%c0_8, %c256] : memref<8x1536xbf16, #tpu.memory_space<vmem>>, vector<8x256xbf16>
    %c256_9 = arith.constant 256 : index
    %c0_10 = arith.constant 0 : index
    %15 = vector.load %arg4[%c256_9, %c0_10] : memref<1536x128xi8, #tpu.memory_space<vmem>>, vector<256x128xi8>
    %16 = arith.sitofp %15 : vector<256x128xi8> to vector<256x128xbf16>
    %cst_11 = arith.constant dense<0.000000e+00> : vector<8x128xf32>
    %17 = tpu.matmul %14, %16, %cst_11 {dimension_numbers = #tpu.dot_dimension_numbers<[1], [0], [0], [1], [0, 0, 1, 1], [], []>} : vector<8x256xbf16>, vector<256x128xbf16>, vector<8x128xf32> -> vector<8x128xf32>
    %18 = vector.extract_strided_slice %4 {offsets = [1, 0], sizes = [1, 128], strides = [1, 1]} : vector<6x128xf32> to vector<1x128xf32>
    %19 = vector.broadcast %18 : vector<1x128xf32> to vector<8x128xf32>
    %20 = arith.mulf %17, %19 : vector<8x128xf32>
    %21 = arith.addf %13, %20 : vector<8x128xf32>
    %c0_12 = arith.constant 0 : index
    %c512 = arith.constant 512 : index
    %22 = vector.load %arg3[%c0_12, %c512] : memref<8x1536xbf16, #tpu.memory_space<vmem>>, vector<8x256xbf16>
    %c512_13 = arith.constant 512 : index
    %c0_14 = arith.constant 0 : index
    %23 = vector.load %arg4[%c512_13, %c0_14] : memref<1536x128xi8, #tpu.memory_space<vmem>>, vector<256x128xi8>
    %24 = arith.sitofp %23 : vector<256x128xi8> to vector<256x128xbf16>
    %cst_15 = arith.constant dense<0.000000e+00> : vector<8x128xf32>
    %25 = tpu.matmul %22, %24, %cst_15 {dimension_numbers = #tpu.dot_dimension_numbers<[1], [0], [0], [1], [0, 0, 1, 1], [], []>} : vector<8x256xbf16>, vector<256x128xbf16>, vector<8x128xf32> -> vector<8x128xf32>
    %26 = vector.extract_strided_slice %4 {offsets = [2, 0], sizes = [1, 128], strides = [1, 1]} : vector<6x128xf32> to vector<1x128xf32>
    %27 = vector.broadcast %26 : vector<1x128xf32> to vector<8x128xf32>
    %28 = arith.mulf %25, %27 : vector<8x128xf32>
    %29 = arith.addf %21, %28 : vector<8x128xf32>
    %c0_16 = arith.constant 0 : index
    %c768 = arith.constant 768 : index
    %30 = vector.load %arg3[%c0_16, %c768] : memref<8x1536xbf16, #tpu.memory_space<vmem>>, vector<8x256xbf16>
    %c768_17 = arith.constant 768 : index
    %c0_18 = arith.constant 0 : index
    %31 = vector.load %arg4[%c768_17, %c0_18] : memref<1536x128xi8, #tpu.memory_space<vmem>>, vector<256x128xi8>
    %32 = arith.sitofp %31 : vector<256x128xi8> to vector<256x128xbf16>
    %cst_19 = arith.constant dense<0.000000e+00> : vector<8x128xf32>
    %33 = tpu.matmul %30, %32, %cst_19 {dimension_numbers = #tpu.dot_dimension_numbers<[1], [0], [0], [1], [0, 0, 1, 1], [], []>} : vector<8x256xbf16>, vector<256x128xbf16>, vector<8x128xf32> -> vector<8x128xf32>
    %34 = vector.extract_strided_slice %4 {offsets = [3, 0], sizes = [1, 128], strides = [1, 1]} : vector<6x128xf32> to vector<1x128xf32>
    %35 = vector.broadcast %34 : vector<1x128xf32> to vector<8x128xf32>
    %36 = arith.mulf %33, %35 : vector<8x128xf32>
    %37 = arith.addf %29, %36 : vector<8x128xf32>
    %c0_20 = arith.constant 0 : index
    %c1024 = arith.constant 1024 : index
    %38 = vector.load %arg3[%c0_20, %c1024] : memref<8x1536xbf16, #tpu.memory_space<vmem>>, vector<8x256xbf16>
    %c1024_21 = arith.constant 1024 : index
    %c0_22 = arith.constant 0 : index
    %39 = vector.load %arg4[%c1024_21, %c0_22] : memref<1536x128xi8, #tpu.memory_space<vmem>>, vector<256x128xi8>
    %40 = arith.sitofp %39 : vector<256x128xi8> to vector<256x128xbf16>
    %cst_23 = arith.constant dense<0.000000e+00> : vector<8x128xf32>
    %41 = tpu.matmul %38, %40, %cst_23 {dimension_numbers = #tpu.dot_dimension_numbers<[1], [0], [0], [1], [0, 0, 1, 1], [], []>} : vector<8x256xbf16>, vector<256x128xbf16>, vector<8x128xf32> -> vector<8x128xf32>
    %42 = vector.extract_strided_slice %4 {offsets = [4, 0], sizes = [1, 128], strides = [1, 1]} : vector<6x128xf32> to vector<1x128xf32>
    %43 = vector.broadcast %42 : vector<1x128xf32> to vector<8x128xf32>
    %44 = arith.mulf %41, %43 : vector<8x128xf32>
    %45 = arith.addf %37, %44 : vector<8x128xf32>
    %c0_24 = arith.constant 0 : index
    %c1280 = arith.constant 1280 : index
    %46 = vector.load %arg3[%c0_24, %c1280] : memref<8x1536xbf16, #tpu.memory_space<vmem>>, vector<8x256xbf16>
    %c1280_25 = arith.constant 1280 : index
    %c0_26 = arith.constant 0 : index
    %47 = vector.load %arg4[%c1280_25, %c0_26] : memref<1536x128xi8, #tpu.memory_space<vmem>>, vector<256x128xi8>
    %48 = arith.sitofp %47 : vector<256x128xi8> to vector<256x128xbf16>
    %cst_27 = arith.constant dense<0.000000e+00> : vector<8x128xf32>
    %49 = tpu.matmul %46, %48, %cst_27 {dimension_numbers = #tpu.dot_dimension_numbers<[1], [0], [0], [1], [0, 0, 1, 1], [], []>} : vector<8x256xbf16>, vector<256x128xbf16>, vector<8x128xf32> -> vector<8x128xf32>
    %50 = vector.extract_strided_slice %4 {offsets = [5, 0], sizes = [1, 128], strides = [1, 1]} : vector<6x128xf32> to vector<1x128xf32>
    %51 = vector.broadcast %50 : vector<1x128xf32> to vector<8x128xf32>
    %52 = arith.mulf %49, %51 : vector<8x128xf32>
    %53 = arith.addf %45, %52 : vector<8x128xf32>
    %c0_28 = arith.constant 0 : index
    %c0_29 = arith.constant 0 : index
    %54 = vector.load %arg7[%c0_28, %c0_29] : memref<8x128xf32, #tpu.memory_space<vmem>>, vector<8x128xf32>
    %55 = arith.addf %54, %53 : vector<8x128xf32>
    %c0_30 = arith.constant 0 : index
    %c0_31 = arith.constant 0 : index
    %56 = vector.load %arg7[%c0_30, %c0_31] : memref<8x128xf32, #tpu.memory_space<vmem>>, vector<8x128xf32>
    tpu.vector_store %arg7[%c0_30, %c0_31], %55 {strides = array<i32>} : memref<8x128xf32, #tpu.memory_space<vmem>>, vector<8x128xf32>,
    return
  }
  func.func @transform_0(%arg0: i32, %arg1: i32, %arg2: i32) -> (i32, i32) {
    %c0_i32 = arith.constant 0 : i32
    return %arg0, %arg2 : i32, i32
  }
  func.func @transform_1(%arg0: i32, %arg1: i32, %arg2: i32) -> (i32, i32) {
    %c0_i32 = arith.constant 0 : i32
    return %arg2, %arg1 : i32, i32
  }
  func.func @transform_2(%arg0: i32, %arg1: i32, %arg2: i32) -> (i32, i32, i32) {
    %c0_i32 = arith.constant 0 : i32
    %c0_i32_0 = arith.constant 0 : i32
    return %arg2, %c0_i32, %arg1 : i32, i32, i32
  }
  func.func @transform_3(%arg0: i32, %arg1: i32, %arg2: i32) -> (i32, i32) {
    %c0_i32 = arith.constant 0 : i32
    %c0_i32_0 = arith.constant 0 : i32
    return %c0_i32, %arg1 : i32, i32
  }
  func.func @transform_4(%arg0: i32, %arg1: i32, %arg2: i32) -> (i32, i32) {
    %c0_i32 = arith.constant 0 : i32
    return %arg0, %arg1 : i32, i32
  }
}

</mosaic_0001>

<llo_original>
// kernel: tpu_custom_call.1
$region0: #{tpu_custom_call.1}
  #allocation0 [shape = 'u32[]', space=smem, size = 0x4, offset = 0x4, fixed_abs, tag = 'smem constant byte address 0x4 - core index']
  #allocation1 [shape = 'u32[144,128]{1,0:T(1,128)}', space=vmem, size = 0x12000, scoped, tag = 'internal scratch']
  %s0 = inlined_call_operand.hbm [shape: bf16[8,1536], index: 0, kind: input, shape index: {}]
  %s1 = inlined_call_operand.hbm [shape: s8[1536,384], index: 1, kind: input, shape index: {}]
  %s2 = inlined_call_operand.vmem [shape: f32[1,6,384], index: 2, kind: input, shape index: {}]
  %s3 = inlined_call_operand.vmem [shape: f32[1,384], index: 3, kind: input, shape index: {}]
  %s4 = inlined_call_operand.hbm [shape: f32[8,384], index: 4, kind: output, shape index: {}]
  %s5 = sld [smem:[#allocation0]]
  $region61: #{tpu_custom_call.1} parent=0
    _
  %s7 = ssub.s32 1, %s5
  %s8 = scalar_select 0, %s7, %s5
  $region1: #{tpu_custom_call.1} parent=0
    #allocation2 [shape = 'u8[24576]{0}', space=vmem, size = 0x6000, scoped, tag = 'input window, operand 0, single buffered']
    #allocation3 [shape = 's32[2]{0}', space=sflag, size = 0x8, scoped, tag = 'scoped memory for tpu_custom_call.1']
    #allocation4 [shape = 's32[2]{0}', space=sflag, size = 0x8, scoped, tag = 'scoped memory for tpu_custom_call.1']
    #allocation5 [shape = 'u8[393216]{0}', space=vmem, size = 0x60000, scoped, tag = 'input window, operand 1']
    #allocation6 [shape = 's32[2]{0}', space=sflag, size = 0x8, scoped, tag = 'scoped memory for tpu_custom_call.1']
    #allocation7 [shape = 'u8[8192]{0}', space=vmem, size = 0x2000, scoped, tag = 'output window, operand 0']
    %9 = vsyncpa [#allocation3], 0
    %10 = vsyncpa [#allocation6], 0
    %s11 = scalar_lea.sflag [#allocation6], 1
    %12 = vsyncpa %s11, 0
    %13 = vsyncpa [#allocation4], 0
    %s14 = scalar_lea.sflag [#allocation4], 1
    %15 = vsyncpa %s14, 0
    loop: start=0, step=1, limit=5
    $region2: #{tpu_custom_call.1} parent=1 // loop_pre_header
      _
    $region3: #{tpu_custom_call.1} parent=1 // loop_header
      %s17 = sphi 0, %s21
      %p18 = scmp.ge.s32.totalorder %s17, 5
      %s24 = sphi 0, %s43
      %s25 = sphi 0, %s39
      %s26 = sphi 0, %s35
      %s27 = sphi 0, %s24
      %s28 = sphi 0, %s25
      %s29 = sphi 0, %s26
      %s30 = sphi 0, %s27
      %s31 = sphi 0, %s28
      %s32 = sphi 0, %s29
      %s48 = sphi 0, %s50
      %s51 = sphi 0, %s48
      %s52 = sphi 0, %s51
      %s68 = sphi 0, %s52
      %s76 = sphi 0, %s78
      %s79 = sphi 0, %s76
      %s80 = sphi 0, %s79
      %s96 = sphi 0, %s80
      %s104 = sphi 0, %s106
      %s107 = sphi 0, %s104
      %s108 = sphi 0, %s107
      %s124 = sphi 0, %s108
      %s130 = sphi 0, %s132
      %s133 = sphi 0, %s130
      %s134 = sphi 0, %s133
      %s150 = sphi 0, %s134
      %s158 = sphi 0, %s160
      %s161 = sphi 0, %s158
      %s162 = sphi 0, %s161
      %s178 = sphi 0, %s162
    $region4: #{tpu_custom_call.1} parent=1 // loop_header_branch
      %20 = sbr.rel (%p18) target = $region8
    $region5: #{tpu_custom_call.1} parent=1 // loop_body
      %s22 = ssub.s32 %s17, 1
      %s23 = ssub.s32 %s17, 2
      %s33 = sadd.s32 1, %s26
      %p34 = scmp.ge.s32.totalorder %s33, 1
      %s35 = scalar_select %p34, 0, %s33
      %s36 = sadd.s32 1, %s25
      %s37 = scalar_select %p34, %s36, %s25
      %p38 = scmp.ge.s32.totalorder %s37, 3
      %s39 = scalar_select %p38, 0, %s37
      %s40 = sadd.s32 1, %s24
      %s41 = scalar_select %p38, %s40, %s24
      %p42 = scmp.ge.s32.totalorder %s41, 1
      %s43 = scalar_select %p42, 0, %s41
      %s44 = ssub.s32 %s24, %s43
      %s45 = ssub.s32 %s26, %s35
      %s46 = sor.u32 %s44, %s45
      %p47 = scmp.eq.s32.totalorder %s46, 0
      %s49 = sadd.s32 %s48, 1
      %s50 = scalar_select %p47, %s48, %s49
      %p53 = pneg %p47
      %p54 = scmp.eq.s32.totalorder %s17, 2
      %p55 = por %p53, %p54
      %p56 = scmp.ne.s32.totalorder %s48, %s51
      %p57 = scmp.eq.s32.totalorder %s17, 0
      %p58 = por %p56, %p57
      %p59 = scmp.ne.s32.totalorder %s48, %s51
      %p60 = scmp.eq.s32.totalorder %s22, 2
      %p61 = por %p59, %p60
      %p62 = scmp.ne.s32.totalorder %s51, %s52
      %p63 = scmp.eq.s32.totalorder %s22, 0
      %p64 = por %p62, %p63
      %p65 = scmp.ne.s32.totalorder %s51, %s52
      %p66 = scmp.eq.s32.totalorder %s23, 2
      %p67 = por %p65, %p66
      %p69 = scmp.ne.s32.totalorder %s52, %s68
      %p70 = scmp.eq.s32.totalorder %s23, 0
      %p71 = por %p69, %p70
      %s72 = ssub.s32 %s26, %s35
      %s73 = ssub.s32 %s25, %s39
      %s74 = sor.u32 %s72, %s73
      %p75 = scmp.eq.s32.totalorder %s74, 0
      %s77 = sadd.s32 %s76, 1
      %s78 = scalar_select %p75, %s76, %s77
      %p81 = pneg %p75
      %p82 = scmp.eq.s32.totalorder %s17, 2
      %p83 = por %p81, %p82
      %p84 = scmp.ne.s32.totalorder %s76, %s79
      %p85 = scmp.eq.s32.totalorder %s17, 0
      %p86 = por %p84, %p85
      %p87 = scmp.ne.s32.totalorder %s76, %s79
      %p88 = scmp.eq.s32.totalorder %s22, 2
      %p89 = por %p87, %p88
      %p90 = scmp.ne.s32.totalorder %s79, %s80
      %p91 = scmp.eq.s32.totalorder %s22, 0
      %p92 = por %p90, %p91
      %p93 = scmp.ne.s32.totalorder %s79, %s80
      %p94 = scmp.eq.s32.totalorder %s23, 2
      %p95 = por %p93, %p94
      %p97 = scmp.ne.s32.totalorder %s80, %s96
      %p98 = scmp.eq.s32.totalorder %s23, 0
      %p99 = por %p97, %p98
      %s100 = ssub.s32 %s26, %s35
      %s101 = ssub.s32 %s25, %s39
      %s102 = sor.u32 %s100, %s101
      %p103 = scmp.eq.s32.totalorder %s102, 0
      %s105 = sadd.s32 %s104, 1
      %s106 = scalar_select %p103, %s104, %s105
      %p109 = pneg %p103
      %p110 = scmp.eq.s32.totalorder %s17, 2
      %p111 = por %p109, %p110
      %p112 = scmp.ne.s32.totalorder %s104, %s107
      %p113 = scmp.eq.s32.totalorder %s17, 0
      %p114 = por %p112, %p113
      %p115 = scmp.ne.s32.totalorder %s104, %s107
      %p116 = scmp.eq.s32.totalorder %s22, 2
      %p117 = por %p115, %p116
      %p118 = scmp.ne.s32.totalorder %s107, %s108
      %p119 = scmp.eq.s32.totalorder %s22, 0
      %p120 = por %p118, %p119
      %p121 = scmp.ne.s32.totalorder %s107, %s108
      %p122 = scmp.eq.s32.totalorder %s23, 2
      %p123 = por %p121, %p122
      %p125 = scmp.ne.s32.totalorder %s108, %s124
      %p126 = scmp.eq.s32.totalorder %s23, 0
      %p127 = por %p125, %p126
      %s128 = ssub.s32 %s25, %s39
      %p129 = scmp.eq.s32.totalorder %s128, 0
      %s131 = sadd.s32 %s130, 1
      %s132 = scalar_select %p129, %s130, %s131
      %p135 = pneg %p129
      %p136 = scmp.eq.s32.totalorder %s17, 2
      %p137 = por %p135, %p136
      %p138 = scmp.ne.s32.totalorder %s130, %s133
      %p139 = scmp.eq.s32.totalorder %s17, 0
      %p140 = por %p138, %p139
      %p141 = scmp.ne.s32.totalorder %s130, %s133
      %p142 = scmp.eq.s32.totalorder %s22, 2
      %p143 = por %p141, %p142
      %p144 = scmp.ne.s32.totalorder %s133, %s134
      %p145 = scmp.eq.s32.totalorder %s22, 0
      %p146 = por %p144, %p145
      %p147 = scmp.ne.s32.totalorder %s133, %s134
      %p148 = scmp.eq.s32.totalorder %s23, 2
      %p149 = por %p147, %p148
      %p151 = scmp.ne.s32.totalorder %s134, %s150
      %p152 = scmp.eq.s32.totalorder %s23, 0
      %p153 = por %p151, %p152
      %s154 = ssub.s32 %s24, %s43
      %s155 = ssub.s32 %s25, %s39
      %s156 = sor.u32 %s154, %s155
      %p157 = scmp.eq.s32.totalorder %s156, 0
      %s159 = sadd.s32 %s158, 1
      %s160 = scalar_select %p157, %s158, %s159
      %p163 = pneg %p157
      %p164 = scmp.eq.s32.totalorder %s17, 2
      %p165 = por %p163, %p164
      %p166 = scmp.ne.s32.totalorder %s158, %s161
      %p167 = scmp.eq.s32.totalorder %s17, 0
      %p168 = por %p166, %p167
      %p169 = scmp.ne.s32.totalorder %s158, %s161
      %p170 = scmp.eq.s32.totalorder %s22, 2
      %p171 = por %p169, %p170
      %p172 = scmp.ne.s32.totalorder %s161, %s162
      %p173 = scmp.eq.s32.totalorder %s22, 0
      %p174 = por %p172, %p173
      %p175 = scmp.ne.s32.totalorder %s161, %s162
      %p176 = scmp.eq.s32.totalorder %s23, 2
      %p177 = por %p175, %p176
      %p179 = scmp.ne.s32.totalorder %s162, %s178
      %p180 = scmp.eq.s32.totalorder %s23, 0
      %p181 = por %p179, %p180
      %p182 = scmp.le.s32.totalorder 1, %s17
      %p183 = scmp.lt.s32.totalorder %s17, 4
      %p184 = pnand %p182, %p183
      %p185 = pneg %p184
      // Predicated region
      $region9: #{tpu_custom_call.1} parent=5 // pred_check
        _
      $region10: #{tpu_custom_call.1} parent=5 // pred_check_branch
        %187 = sbr.rel (%p184) target = $region12
      $region11: #{tpu_custom_call.1} parent=5 // pred_region
        %s188 = ssub.s32 %s17, 1
        // Predicated region
        $region13: #{tpu_custom_call.1} parent=11 // pred_check
          %p189 = pneg %p64
        $region14: #{tpu_custom_call.1} parent=11 // pred_check_branch
          %191 = sbr.rel (%p189) target = $region16
        $region15: #{tpu_custom_call.1} parent=11 // pred_region
          %s192 = smul.u32 12, %s29
          %s194 = ssub.s32 768, 768
          %195 = vsyncadd [#allocation3], %s194
          %s196 = smul.addr %s27, 12
          %s197 = sadd.s32 %s192, %s196
          %s198 = smul.addr %s197, 64
          %s199 = scalar_lea.hbm %s0, %s198
          %s201 = sshll.u32 [#allocation2], 4
          %s202 = int_to_ptr.vmem [resolvable:$true] %s201
          %204 = dma.hbm_to_vmem [thread:$0]  %s199, 768, %s202, [#allocation3]
        $region16: #{tpu_custom_call.1} parent=11 // pred_fallthru
          _
      $region12: #{tpu_custom_call.1} parent=5 // pred_fallthru
        _
      %p205 = scmp.lt.s32.totalorder %s17, 3
      // Predicated region
      $region17: #{tpu_custom_call.1} parent=5 // pred_check
        %p206 = pneg %p205
      $region18: #{tpu_custom_call.1} parent=5 // pred_check_branch
        %208 = sbr.rel (%p206) target = $region20
      $region19: #{tpu_custom_call.1} parent=5 // pred_region
        // Predicated region
        $region21: #{tpu_custom_call.1} parent=19 // pred_check
          %p209 = pneg %p86
        $region22: #{tpu_custom_call.1} parent=19 // pred_check_branch
          %211 = sbr.rel (%p209) target = $region24
        $region23: #{tpu_custom_call.1} parent=19 // pred_region
          %s212 = sand.u32 %s76, 1
          %s213 = scalar_lea.sflag [#allocation6], %s212
          %s214 = sand.u32 %s76, 1
          %s215 = smul.addr %s214, 384
          %s216 = scalar_lea.vmem [#allocation5], %s215
          %s217 = smul.u32 48, %s26
          %s219 = ssub.s32 6144, 6144
          %220 = vsyncadd %s213, %s219
          %s221 = smul.addr %s217, 3
          %s222 = sadd.s32 %s25, %s221
          %s223 = smul.addr %s222, 128
          %s224 = scalar_lea.hbm %s1, %s223
          %s225 = sshll.u32 %s216, 4
          %s226 = int_to_ptr.vmem [resolvable:$true] %s225
          %231 = dma.hbm_to_vmem [thread:$0]  %s224, 6144, %s226, %s213, 384, 128, 8
        $region24: #{tpu_custom_call.1} parent=19 // pred_fallthru
          _
        // Predicated region
        $region25: #{tpu_custom_call.1} parent=19 // pred_check
          %p232 = pneg %p114
        $region26: #{tpu_custom_call.1} parent=19 // pred_check_branch
          %234 = sbr.rel (%p232) target = $region28
        $region27: #{tpu_custom_call.1} parent=19 // pred_region
          %p235 = scmp.lt.s32.totalorder %s26, 0
          %s236 = scalar_select %p235, %s26, 0
          %p237 = scmp.lt.s32.totalorder %s25, 2
          %s238 = scalar_select %p237, %s25, 2
          %s239 = smul.addr %s236, 3
          %s240 = sadd.s32 %s238, %s239
          %s241 = smul.addr %s240, 8
          %s242 = scalar_lea.vmem %s2, %s241
        $region28: #{tpu_custom_call.1} parent=19 // pred_fallthru
          _
        // Predicated region
        $region29: #{tpu_custom_call.1} parent=19 // pred_check
          %p243 = pneg %p140
        $region30: #{tpu_custom_call.1} parent=19 // pred_check_branch
          %245 = sbr.rel (%p243) target = $region32
        $region31: #{tpu_custom_call.1} parent=19 // pred_region
          %p246 = scmp.lt.s32.totalorder %s25, 2
          %s247 = scalar_select %p246, %s25, 2
          %s248 = scalar_lea.vmem %s3, %s247
        $region32: #{tpu_custom_call.1} parent=19 // pred_fallthru
          _
      $region20: #{tpu_custom_call.1} parent=5 // pred_fallthru
        _
      %p249 = scmp.le.s32.totalorder 1, %s17
      %p250 = scmp.lt.s32.totalorder %s17, 4
      %p251 = pnand %p249, %p250
      %p252 = pneg %p251
      // Predicated region
      $region33: #{tpu_custom_call.1} parent=5 // pred_check
        _
      $region34: #{tpu_custom_call.1} parent=5 // pred_check_branch
        %254 = sbr.rel (%p251) target = $region36
      $region35: #{tpu_custom_call.1} parent=5 // pred_region
        %s255 = ssub.s32 %s17, 1
        // Predicated region
        $region37: #{tpu_custom_call.1} parent=35 // pred_check
          %p256 = pneg %p64
        $region38: #{tpu_custom_call.1} parent=35 // pred_check_branch
          %258 = sbr.rel (%p256) target = $region40
        $region39: #{tpu_custom_call.1} parent=35 // pred_region
          %259 = dma.done [#allocation3], 768
        $region40: #{tpu_custom_call.1} parent=35 // pred_fallthru
          _
        %s260 = sand.u32 %s79, 1
        %s261 = scalar_lea.sflag [#allocation6], %s260
        %s262 = sand.u32 %s79, 1
        %s263 = smul.addr %s262, 384
        %s264 = scalar_lea.vmem [#allocation5], %s263
        // Predicated region
        $region41: #{tpu_custom_call.1} parent=35 // pred_check
          %p265 = pneg %p92
        $region42: #{tpu_custom_call.1} parent=35 // pred_check_branch
          %267 = sbr.rel (%p265) target = $region44
        $region43: #{tpu_custom_call.1} parent=35 // pred_region
          %268 = dma.done %s261, 6144
        $region44: #{tpu_custom_call.1} parent=35 // pred_fallthru
          _
        %p269 = pneg %p64
        %p270 = pneg %p61
        %s271 = sand.u32 %s79, 1
        %s272 = scalar_lea.sflag [#allocation6], %s271
        %s273 = sand.u32 %s79, 1
        %s274 = smul.addr %s273, 384
        %s275 = scalar_lea.vmem [#allocation5], %s274
        %p276 = pneg %p92
        %p277 = pneg %p89
        %p278 = scmp.lt.s32.totalorder %s29, 0
        %s279 = scalar_select %p278, %s29, 0
        %p280 = scmp.lt.s32.totalorder %s28, 2
        %s281 = scalar_select %p280, %s28, 2
        %s282 = smul.addr %s279, 3
        %s283 = sadd.s32 %s281, %s282
        %s284 = smul.addr %s283, 8
        %s285 = scalar_lea.vmem %s2, %s284
        %p286 = pneg %p120
        %p287 = pneg %p117
        %p288 = scmp.lt.s32.totalorder %s28, 2
        %s289 = scalar_select %p288, %s28, 2
        %s290 = scalar_lea.vmem %s3, %s289
        %p291 = pneg %p146
        %p292 = pneg %p143
        %p293 = pneg %p174
        %p294 = pneg %p171
        %s295 = sand.u32 %s161, 1
        %s296 = scalar_lea.sflag [#allocation4], %s295
        %s297 = sand.u32 %s161, 1
        %s298 = smul.addr %s297, 8
        %s299 = scalar_lea.vmem [#allocation7], %s298
        %s300 = smul.u32 12, %s29
        %s301 = smul.u32 48, %s29
        %p302 = scmp.lt.s32.totalorder %s29, 0
        %s303 = scalar_select %p302, %s29, 0
        %p304 = scmp.lt.s32.totalorder %s28, 2
        %s305 = scalar_select %p304, %s28, 2
        %s306 = smul.addr %s303, 3
        %s307 = sadd.s32 %s305, %s306
        %s308 = smul.addr %s307, 8
        %s309 = scalar_lea.vmem %s2, %s308
        %p310 = scmp.lt.s32.totalorder %s28, 2
        %s311 = scalar_select %p310, %s28, 2
        %s312 = scalar_lea.vmem %s3, %s311
        %p314 = scmp.eq.s32.totalorder %s29, 0
        // Predicated region
        $region45: #{tpu_custom_call.1} parent=35 // pred_check
          %p315 = pneg %p314
        $region46: #{tpu_custom_call.1} parent=35 // pred_check_branch
          %317 = sbr.rel (%p315) target = $region48
        $region47: #{tpu_custom_call.1} parent=35 // pred_region
          %v318 = vld [vmem:[%s312] sm:$0x1]
          %v320 = vlaneseq
          %v321 = vshrl.u32 %v320, 7
          %v322 = vsub.s32 0, %v321
          %v323 = vrot.slane %v318, %v322
          %325 = vst [vmem:[%s299] sm:$0xff] %v323
        $region48: #{tpu_custom_call.1} parent=35 // pred_fallthru
          _
        %v326 = vld [vmem:[%s309] sm:$0x3f]
        %v327 = vld [vmem:[#allocation2] sm:$0xff]
        %v328 = vld [vmem:[%s264] sm:$0xff]
        %v329 = vld [vmem:[%s264 + $0x8] sm:$0xff]
        %v330 = vld [vmem:[%s264 + $0x10] sm:$0xff]
        %v331 = vld [vmem:[%s264 + $0x18] sm:$0xff]
        %v332 = vld [vmem:[%s264 + $0x20] sm:$0xff]
        %v333 = vld [vmem:[%s264 + $0x28] sm:$0xff]
        %v334 = vld [vmem:[%s264 + $0x30] sm:$0xff]
        %v335 = vld [vmem:[%s264 + $0x38] sm:$0xff]
        %v336 = vunpack.c.l.s8.bf16 %v328
        %v337 = vunpack.c.h.s8.bf16 %v328
        %v338 = vunpack.c.l.s8.bf16 %v329
        %v339 = vunpack.c.h.s8.bf16 %v329
        %v340 = vunpack.c.l.s8.bf16 %v330
        %v341 = vunpack.c.h.s8.bf16 %v330
        %v342 = vunpack.c.l.s8.bf16 %v331
        %v343 = vunpack.c.h.s8.bf16 %v331
        %v344 = vunpack.c.l.s8.bf16 %v332
        %v345 = vunpack.c.h.s8.bf16 %v332
        %v346 = vunpack.c.l.s8.bf16 %v333
        %v347 = vunpack.c.h.s8.bf16 %v333
        %v348 = vunpack.c.l.s8.bf16 %v334
        %v349 = vunpack.c.h.s8.bf16 %v334
        %v350 = vunpack.c.l.s8.bf16 %v335
        %v351 = vunpack.c.h.s8.bf16 %v335
        %v353 = vunpack.c.l.b16 %v327
        %v354 = vunpack.c.h.b16 %v327
        %v355 = vpack.c.b16 %v353, %v353
        %v356 = vpack.c.b16 %v354, %v354
        %359 = vmatprep.subr.bf16.mxu0 0
        %360 = vmatpush1.bf16.msra.mxu0 %v336
        %361 = vmatprep.subr.bf16.mxu0 0
        %362 = vmatpush1.bf16.msra.mxu0 %v337
        %363 = vmatprep.subr.bf16.mxu0 0
        %364 = vmatpush1.bf16.msra.mxu0 %v338
        %365 = vmatprep.subr.bf16.mxu0 0
        %366 = vmatpush1.bf16.msra.mxu0 %v339
        %367 = vmatprep.subr.bf16.mxu0 0
        %368 = vmatpush1.bf16.msra.mxu0 %v340
        %369 = vmatprep.subr.bf16.mxu0 0
        %370 = vmatpush1.bf16.msra.mxu0 %v341
        %371 = vmatprep.subr.bf16.mxu0 0
        %372 = vmatpush1.bf16.msra.mxu0 %v342
        %373 = vmatprep.subr.bf16.mxu0 0
        %374 = vmatpush1.bf16.msra.mxu0 %v343
        %375 = vmatprep.subr.bf16.mxu0 0
        %376 = vmatpush1.bf16.msra.mxu0 %v344
        %377 = vmatprep.subr.bf16.mxu0 0
        %378 = vmatpush1.bf16.msra.mxu0 %v345
        %379 = vmatprep.subr.bf16.mxu0 0
        %380 = vmatpush1.bf16.msra.mxu0 %v346
        %381 = vmatprep.subr.bf16.mxu0 0
        %382 = vmatpush1.bf16.msra.mxu0 %v347
        %383 = vmatprep.subr.bf16.mxu0 0
        %384 = vmatpush1.bf16.msra.mxu0 %v348
        %385 = vmatprep.subr.bf16.mxu0 0
        %386 = vmatpush1.bf16.msra.mxu0 %v349
        %387 = vmatprep.subr.bf16.mxu0 0
        %388 = vmatpush1.bf16.msra.mxu0 %v350
        %389 = vmatprep.subr.bf16.mxu0 0
        %390 = vmatpush1.bf16.msra.mxu0 %v351
        %391 = vmatprep.mubr.bf16.mxu0 %v356
        %392 = vmatmul.mubr.bf16.gmra.mrb[0].mxu0 %v355
        %v393 = vpop.f32.mrb[0].mxu0
        %v394 = vadd.f32 0.0, %v393
        %v395 = vpop.f32.mrb[0].mxu0
        %v396 = vpop.f32.mrb[0].mxu0
        %v397 = vpop.f32.mrb[0].mxu0
        %398 = vdwg.mxu0
        %v399 = vlaneseq
        %v400 = vshrl.u32 %v399, 7
        %v401 = vsub.s32 0, %v400
        %v402 = vrot.slane %v326, %v401
        %v403 = vmul.f32 %v394, %v402
        %v404 = vadd.f32 %v403, 0.0
        %v405 = vld [vmem:[#allocation2 + $0x8] sm:$0xff]
        %v406 = vld [vmem:[%s264 + $0x40] sm:$0xff]
        %v407 = vld [vmem:[%s264 + $0x48] sm:$0xff]
        %v408 = vld [vmem:[%s264 + $0x50] sm:$0xff]
        %v409 = vld [vmem:[%s264 + $0x58] sm:$0xff]
        %v410 = vld [vmem:[%s264 + $0x60] sm:$0xff]
        %v411 = vld [vmem:[%s264 + $0x68] sm:$0xff]
        %v412 = vld [vmem:[%s264 + $0x70] sm:$0xff]
        %v413 = vld [vmem:[%s264 + $0x78] sm:$0xff]
        %v414 = vunpack.c.l.s8.bf16 %v406
        %v415 = vunpack.c.h.s8.bf16 %v406
        %v416 = vunpack.c.l.s8.bf16 %v407
        %v417 = vunpack.c.h.s8.bf16 %v407
        %v418 = vunpack.c.l.s8.bf16 %v408
        %v419 = vunpack.c.h.s8.bf16 %v408
        %v420 = vunpack.c.l.s8.bf16 %v409
        %v421 = vunpack.c.h.s8.bf16 %v409
        %v422 = vunpack.c.l.s8.bf16 %v410
        %v423 = vunpack.c.h.s8.bf16 %v410
        %v424 = vunpack.c.l.s8.bf16 %v411
        %v425 = vunpack.c.h.s8.bf16 %v411
        %v426 = vunpack.c.l.s8.bf16 %v412
        %v427 = vunpack.c.h.s8.bf16 %v412
        %v428 = vunpack.c.l.s8.bf16 %v413
        %v429 = vunpack.c.h.s8.bf16 %v413
        %v431 = vunpack.c.l.b16 %v405
        %v432 = vunpack.c.h.b16 %v405
        %v433 = vpack.c.b16 %v431, %v431
        %v434 = vpack.c.b16 %v432, %v432
        %437 = vmatprep.subr.bf16.mxu0 0
        %438 = vmatpush1.bf16.msra.mxu0 %v414
        %439 = vmatprep.subr.bf16.mxu0 0
        %440 = vmatpush1.bf16.msra.mxu0 %v415
        %441 = vmatprep.subr.bf16.mxu0 0
        %442 = vmatpush1.bf16.msra.mxu0 %v416
        %443 = vmatprep.subr.bf16.mxu0 0
        %444 = vmatpush1.bf16.msra.mxu0 %v417
        %445 = vmatprep.subr.bf16.mxu0 0
        %446 = vmatpush1.bf16.msra.mxu0 %v418
        %447 = vmatprep.subr.bf16.mxu0 0
        %448 = vmatpush1.bf16.msra.mxu0 %v419
        %449 = vmatprep.subr.bf16.mxu0 0
        %450 = vmatpush1.bf16.msra.mxu0 %v420
        %451 = vmatprep.subr.bf16.mxu0 0
        %452 = vmatpush1.bf16.msra.mxu0 %v421
        %453 = vmatprep.subr.bf16.mxu0 0
        %454 = vmatpush1.bf16.msra.mxu0 %v422
        %455 = vmatprep.subr.bf16.mxu0 0
        %456 = vmatpush1.bf16.msra.mxu0 %v423
        %457 = vmatprep.subr.bf16.mxu0 0
        %458 = vmatpush1.bf16.msra.mxu0 %v424
        %459 = vmatprep.subr.bf16.mxu0 0
        %460 = vmatpush1.bf16.msra.mxu0 %v425
        %461 = vmatprep.subr.bf16.mxu0 0
        %462 = vmatpush1.bf16.msra.mxu0 %v426
        %463 = vmatprep.subr.bf16.mxu0 0
        %464 = vmatpush1.bf16.msra.mxu0 %v427
        %465 = vmatprep.subr.bf16.mxu0 0
        %466 = vmatpush1.bf16.msra.mxu0 %v428
        %467 = vmatprep.subr.bf16.mxu0 0
        %468 = vmatpush1.bf16.msra.mxu0 %v429
        %469 = vmatprep.mubr.bf16.mxu0 %v434
        %470 = vmatmul.mubr.bf16.gmra.mrb[0].mxu0 %v433
        %v471 = vpop.f32.mrb[0].mxu0
        %v472 = vadd.f32 0.0, %v471
        %v473 = vpop.f32.mrb[0].mxu0
        %v474 = vpop.f32.mrb[0].mxu0
        %v475 = vpop.f32.mrb[0].mxu0
        %476 = vdwg.mxu0
        %v477 = vlaneseq
        %v478 = vshrl.u32 %v477, 7
        %v479 = vsub.s32 1, %v478
        %v480 = vrot.slane %v326, %v479
        %v481 = vmul.f32 %v472, %v480
        %v482 = vadd.f32 %v404, %v481
        %v483 = vld [vmem:[#allocation2 + $0x10] sm:$0xff]
        %v484 = vld [vmem:[%s264 + $0x80] sm:$0xff]
        %v485 = vld [vmem:[%s264 + $0x88] sm:$0xff]
        %v486 = vld [vmem:[%s264 + $0x90] sm:$0xff]
        %v487 = vld [vmem:[%s264 + $0x98] sm:$0xff]
        %v488 = vld [vmem:[%s264 + $0xa0] sm:$0xff]
        %v489 = vld [vmem:[%s264 + $0xa8] sm:$0xff]
        %v490 = vld [vmem:[%s264 + $0xb0] sm:$0xff]
        %v491 = vld [vmem:[%s264 + $0xb8] sm:$0xff]
        %v492 = vunpack.c.l.s8.bf16 %v484
        %v493 = vunpack.c.h.s8.bf16 %v484
        %v494 = vunpack.c.l.s8.bf16 %v485
        %v495 = vunpack.c.h.s8.bf16 %v485
        %v496 = vunpack.c.l.s8.bf16 %v486
        %v497 = vunpack.c.h.s8.bf16 %v486
        %v498 = vunpack.c.l.s8.bf16 %v487
        %v499 = vunpack.c.h.s8.bf16 %v487
        %v500 = vunpack.c.l.s8.bf16 %v488
        %v501 = vunpack.c.h.s8.bf16 %v488
        %v502 = vunpack.c.l.s8.bf16 %v489
        %v503 = vunpack.c.h.s8.bf16 %v489
        %v504 = vunpack.c.l.s8.bf16 %v490
        %v505 = vunpack.c.h.s8.bf16 %v490
        %v506 = vunpack.c.l.s8.bf16 %v491
        %v507 = vunpack.c.h.s8.bf16 %v491
        %v509 = vunpack.c.l.b16 %v483
        %v510 = vunpack.c.h.b16 %v483
        %v511 = vpack.c.b16 %v509, %v509
        %v512 = vpack.c.b16 %v510, %v510
        %515 = vmatprep.subr.bf16.mxu0 0
        %516 = vmatpush1.bf16.msra.mxu0 %v492
        %517 = vmatprep.subr.bf16.mxu0 0
        %518 = vmatpush1.bf16.msra.mxu0 %v493
        %519 = vmatprep.subr.bf16.mxu0 0
        %520 = vmatpush1.bf16.msra.mxu0 %v494
        %521 = vmatprep.subr.bf16.mxu0 0
        %522 = vmatpush1.bf16.msra.mxu0 %v495
        %523 = vmatprep.subr.bf16.mxu0 0
        %524 = vmatpush1.bf16.msra.mxu0 %v496
        %525 = vmatprep.subr.bf16.mxu0 0
        %526 = vmatpush1.bf16.msra.mxu0 %v497
        %527 = vmatprep.subr.bf16.mxu0 0
        %528 = vmatpush1.bf16.msra.mxu0 %v498
        %529 = vmatprep.subr.bf16.mxu0 0
        %530 = vmatpush1.bf16.msra.mxu0 %v499
        %531 = vmatprep.subr.bf16.mxu0 0
        %532 = vmatpush1.bf16.msra.mxu0 %v500
        %533 = vmatprep.subr.bf16.mxu0 0
        %534 = vmatpush1.bf16.msra.mxu0 %v501
        %535 = vmatprep.subr.bf16.mxu0 0
        %536 = vmatpush1.bf16.msra.mxu0 %v502
        %537 = vmatprep.subr.bf16.mxu0 0
        %538 = vmatpush1.bf16.msra.mxu0 %v503
        %539 = vmatprep.subr.bf16.mxu0 0
        %540 = vmatpush1.bf16.msra.mxu0 %v504
        %541 = vmatprep.subr.bf16.mxu0 0
        %542 = vmatpush1.bf16.msra.mxu0 %v505
        %543 = vmatprep.subr.bf16.mxu0 0
        %544 = vmatpush1.bf16.msra.mxu0 %v506
        %545 = vmatprep.subr.bf16.mxu0 0
        %546 = vmatpush1.bf16.msra.mxu0 %v507
        %547 = vmatprep.mubr.bf16.mxu0 %v512
        %548 = vmatmul.mubr.bf16.gmra.mrb[0].mxu0 %v511
        %v549 = vpop.f32.mrb[0].mxu0
        %v550 = vadd.f32 0.0, %v549
        %v551 = vpop.f32.mrb[0].mxu0
        %v552 = vpop.f32.mrb[0].mxu0
        %v553 = vpop.f32.mrb[0].mxu0
        %554 = vdwg.mxu0
        %v555 = vlaneseq
        %v556 = vshrl.u32 %v555, 7
        %v557 = vsub.s32 2, %v556
        %v558 = vrot.slane %v326, %v557
        %v559 = vmul.f32 %v550, %v558
        %v560 = vadd.f32 %v482, %v559
        %v561 = vld [vmem:[#allocation2 + $0x18] sm:$0xff]
        %v562 = vld [vmem:[%s264 + $0xc0] sm:$0xff]
        %v563 = vld [vmem:[%s264 + $0xc8] sm:$0xff]
        %v564 = vld [vmem:[%s264 + $0xd0] sm:$0xff]
        %v565 = vld [vmem:[%s264 + $0xd8] sm:$0xff]
        %v566 = vld [vmem:[%s264 + $0xe0] sm:$0xff]
        %v567 = vld [vmem:[%s264 + $0xe8] sm:$0xff]
        %v568 = vld [vmem:[%s264 + $0xf0] sm:$0xff]
        %v569 = vld [vmem:[%s264 + $0xf8] sm:$0xff]
        %v570 = vunpack.c.l.s8.bf16 %v562
        %v571 = vunpack.c.h.s8.bf16 %v562
        %v572 = vunpack.c.l.s8.bf16 %v563
        %v573 = vunpack.c.h.s8.bf16 %v563
        %v574 = vunpack.c.l.s8.bf16 %v564
        %v575 = vunpack.c.h.s8.bf16 %v564
        %v576 = vunpack.c.l.s8.bf16 %v565
        %v577 = vunpack.c.h.s8.bf16 %v565
        %v578 = vunpack.c.l.s8.bf16 %v566
        %v579 = vunpack.c.h.s8.bf16 %v566
        %v580 = vunpack.c.l.s8.bf16 %v567
        %v581 = vunpack.c.h.s8.bf16 %v567
        %v582 = vunpack.c.l.s8.bf16 %v568
        %v583 = vunpack.c.h.s8.bf16 %v568
        %v584 = vunpack.c.l.s8.bf16 %v569
        %v585 = vunpack.c.h.s8.bf16 %v569
        %v587 = vunpack.c.l.b16 %v561
        %v588 = vunpack.c.h.b16 %v561
        %v589 = vpack.c.b16 %v587, %v587
        %v590 = vpack.c.b16 %v588, %v588
        %593 = vmatprep.subr.bf16.mxu0 0
        %594 = vmatpush1.bf16.msra.mxu0 %v570
        %595 = vmatprep.subr.bf16.mxu0 0
        %596 = vmatpush1.bf16.msra.mxu0 %v571
        %597 = vmatprep.subr.bf16.mxu0 0
        %598 = vmatpush1.bf16.msra.mxu0 %v572
        %599 = vmatprep.subr.bf16.mxu0 0
        %600 = vmatpush1.bf16.msra.mxu0 %v573
        %601 = vmatprep.subr.bf16.mxu0 0
        %602 = vmatpush1.bf16.msra.mxu0 %v574
        %603 = vmatprep.subr.bf16.mxu0 0
        %604 = vmatpush1.bf16.msra.mxu0 %v575
        %605 = vmatprep.subr.bf16.mxu0 0
        %606 = vmatpush1.bf16.msra.mxu0 %v576
        %607 = vmatprep.subr.bf16.mxu0 0
        %608 = vmatpush1.bf16.msra.mxu0 %v577
        %609 = vmatprep.subr.bf16.mxu0 0
        %610 = vmatpush1.bf16.msra.mxu0 %v578
        %611 = vmatprep.subr.bf16.mxu0 0
        %612 = vmatpush1.bf16.msra.mxu0 %v579
        %613 = vmatprep.subr.bf16.mxu0 0
        %614 = vmatpush1.bf16.msra.mxu0 %v580
        %615 = vmatprep.subr.bf16.mxu0 0
        %616 = vmatpush1.bf16.msra.mxu0 %v581
        %617 = vmatprep.subr.bf16.mxu0 0
        %618 = vmatpush1.bf16.msra.mxu0 %v582
        %619 = vmatprep.subr.bf16.mxu0 0
        %620 = vmatpush1.bf16.msra.mxu0 %v583
        %621 = vmatprep.subr.bf16.mxu0 0
        %622 = vmatpush1.bf16.msra.mxu0 %v584
        %623 = vmatprep.subr.bf16.mxu0 0
        %624 = vmatpush1.bf16.msra.mxu0 %v585
        %625 = vmatprep.mubr.bf16.mxu0 %v590
        %626 = vmatmul.mubr.bf16.gmra.mrb[0].mxu0 %v589
        %v627 = vpop.f32.mrb[0].mxu0
        %v628 = vadd.f32 0.0, %v627
        %v629 = vpop.f32.mrb[0].mxu0
        %v630 = vpop.f32.mrb[0].mxu0
        %v631 = vpop.f32.mrb[0].mxu0
        %632 = vdwg.mxu0
        %v633 = vlaneseq
        %v634 = vshrl.u32 %v633, 7
        %v635 = vsub.s32 3, %v634
        %v636 = vrot.slane %v326, %v635
        %v637 = vmul.f32 %v628, %v636
        %v638 = vadd.f32 %v560, %v637
        %v639 = vld [vmem:[#allocation2 + $0x20] sm:$0xff]
        %v640 = vld [vmem:[%s264 + $0x100] sm:$0xff]
        %v641 = vld [vmem:[%s264 + $0x108] sm:$0xff]
        %v642 = vld [vmem:[%s264 + $0x110] sm:$0xff]
        %v643 = vld [vmem:[%s264 + $0x118] sm:$0xff]
        %v644 = vld [vmem:[%s264 + $0x120] sm:$0xff]
        %v645 = vld [vmem:[%s264 + $0x128] sm:$0xff]
        %v646 = vld [vmem:[%s264 + $0x130] sm:$0xff]
        %v647 = vld [vmem:[%s264 + $0x138] sm:$0xff]
        %v648 = vunpack.c.l.s8.bf16 %v640
        %v649 = vunpack.c.h.s8.bf16 %v640
        %v650 = vunpack.c.l.s8.bf16 %v641
        %v651 = vunpack.c.h.s8.bf16 %v641
        %v652 = vunpack.c.l.s8.bf16 %v642
        %v653 = vunpack.c.h.s8.bf16 %v642
        %v654 = vunpack.c.l.s8.bf16 %v643
        %v655 = vunpack.c.h.s8.bf16 %v643
        %v656 = vunpack.c.l.s8.bf16 %v644
        %v657 = vunpack.c.h.s8.bf16 %v644
        %v658 = vunpack.c.l.s8.bf16 %v645
        %v659 = vunpack.c.h.s8.bf16 %v645
        %v660 = vunpack.c.l.s8.bf16 %v646
        %v661 = vunpack.c.h.s8.bf16 %v646
        %v662 = vunpack.c.l.s8.bf16 %v647
        %v663 = vunpack.c.h.s8.bf16 %v647
        %v665 = vunpack.c.l.b16 %v639
        %v666 = vunpack.c.h.b16 %v639
        %v667 = vpack.c.b16 %v665, %v665
        %v668 = vpack.c.b16 %v666, %v666
        %671 = vmatprep.subr.bf16.mxu0 0
        %672 = vmatpush1.bf16.msra.mxu0 %v648
        %673 = vmatprep.subr.bf16.mxu0 0
        %674 = vmatpush1.bf16.msra.mxu0 %v649
        %675 = vmatprep.subr.bf16.mxu0 0
        %676 = vmatpush1.bf16.msra.mxu0 %v650
        %677 = vmatprep.subr.bf16.mxu0 0
        %678 = vmatpush1.bf16.msra.mxu0 %v651
        %679 = vmatprep.subr.bf16.mxu0 0
        %680 = vmatpush1.bf16.msra.mxu0 %v652
        %681 = vmatprep.subr.bf16.mxu0 0
        %682 = vmatpush1.bf16.msra.mxu0 %v653
        %683 = vmatprep.subr.bf16.mxu0 0
        %684 = vmatpush1.bf16.msra.mxu0 %v654
        %685 = vmatprep.subr.bf16.mxu0 0
        %686 = vmatpush1.bf16.msra.mxu0 %v655
        %687 = vmatprep.subr.bf16.mxu0 0
        %688 = vmatpush1.bf16.msra.mxu0 %v656
        %689 = vmatprep.subr.bf16.mxu0 0
        %690 = vmatpush1.bf16.msra.mxu0 %v657
        %691 = vmatprep.subr.bf16.mxu0 0
        %692 = vmatpush1.bf16.msra.mxu0 %v658
        %693 = vmatprep.subr.bf16.mxu0 0
        %694 = vmatpush1.bf16.msra.mxu0 %v659
        %695 = vmatprep.subr.bf16.mxu0 0
        %696 = vmatpush1.bf16.msra.mxu0 %v660
        %697 = vmatprep.subr.bf16.mxu0 0
        %698 = vmatpush1.bf16.msra.mxu0 %v661
        %699 = vmatprep.subr.bf16.mxu0 0
        %700 = vmatpush1.bf16.msra.mxu0 %v662
        %701 = vmatprep.subr.bf16.mxu0 0
        %702 = vmatpush1.bf16.msra.mxu0 %v663
        %703 = vmatprep.mubr.bf16.mxu0 %v668
        %704 = vmatmul.mubr.bf16.gmra.mrb[0].mxu0 %v667
        %v705 = vpop.f32.mrb[0].mxu0
        %v706 = vadd.f32 0.0, %v705
        %v707 = vpop.f32.mrb[0].mxu0
        %v708 = vpop.f32.mrb[0].mxu0
        %v709 = vpop.f32.mrb[0].mxu0
        %710 = vdwg.mxu0
        %v711 = vlaneseq
        %v712 = vshrl.u32 %v711, 7
        %v713 = vsub.s32 4, %v712
        %v714 = vrot.slane %v326, %v713
        %v715 = vmul.f32 %v706, %v714
        %v716 = vadd.f32 %v638, %v715
        %v717 = vld [vmem:[#allocation2 + $0x28] sm:$0xff]
        %v718 = vld [vmem:[%s264 + $0x140] sm:$0xff]
        %v719 = vld [vmem:[%s264 + $0x148] sm:$0xff]
        %v720 = vld [vmem:[%s264 + $0x150] sm:$0xff]
        %v721 = vld [vmem:[%s264 + $0x158] sm:$0xff]
        %v722 = vld [vmem:[%s264 + $0x160] sm:$0xff]
        %v723 = vld [vmem:[%s264 + $0x168] sm:$0xff]
        %v724 = vld [vmem:[%s264 + $0x170] sm:$0xff]
        %v725 = vld [vmem:[%s264 + $0x178] sm:$0xff]
        %v726 = vunpack.c.l.s8.bf16 %v718
        %v727 = vunpack.c.h.s8.bf16 %v718
        %v728 = vunpack.c.l.s8.bf16 %v719
        %v729 = vunpack.c.h.s8.bf16 %v719
        %v730 = vunpack.c.l.s8.bf16 %v720
        %v731 = vunpack.c.h.s8.bf16 %v720
        %v732 = vunpack.c.l.s8.bf16 %v721
        %v733 = vunpack.c.h.s8.bf16 %v721
        %v734 = vunpack.c.l.s8.bf16 %v722
        %v735 = vunpack.c.h.s8.bf16 %v722
        %v736 = vunpack.c.l.s8.bf16 %v723
        %v737 = vunpack.c.h.s8.bf16 %v723
        %v738 = vunpack.c.l.s8.bf16 %v724
        %v739 = vunpack.c.h.s8.bf16 %v724
        %v740 = vunpack.c.l.s8.bf16 %v725
        %v741 = vunpack.c.h.s8.bf16 %v725
        %v743 = vunpack.c.l.b16 %v717
        %v744 = vunpack.c.h.b16 %v717
        %v745 = vpack.c.b16 %v743, %v743
        %v746 = vpack.c.b16 %v744, %v744
        %749 = vmatprep.subr.bf16.mxu0 0
        %750 = vmatpush1.bf16.msra.mxu0 %v726
        %751 = vmatprep.subr.bf16.mxu0 0
        %752 = vmatpush1.bf16.msra.mxu0 %v727
        %753 = vmatprep.subr.bf16.mxu0 0
        %754 = vmatpush1.bf16.msra.mxu0 %v728
        %755 = vmatprep.subr.bf16.mxu0 0
        %756 = vmatpush1.bf16.msra.mxu0 %v729
        %757 = vmatprep.subr.bf16.mxu0 0
        %758 = vmatpush1.bf16.msra.mxu0 %v730
        %759 = vmatprep.subr.bf16.mxu0 0
        %760 = vmatpush1.bf16.msra.mxu0 %v731
        %761 = vmatprep.subr.bf16.mxu0 0
        %762 = vmatpush1.bf16.msra.mxu0 %v732
        %763 = vmatprep.subr.bf16.mxu0 0
        %764 = vmatpush1.bf16.msra.mxu0 %v733
        %765 = vmatprep.subr.bf16.mxu0 0
        %766 = vmatpush1.bf16.msra.mxu0 %v734
        %767 = vmatprep.subr.bf16.mxu0 0
        %768 = vmatpush1.bf16.msra.mxu0 %v735
        %769 = vmatprep.subr.bf16.mxu0 0
        %770 = vmatpush1.bf16.msra.mxu0 %v736
        %771 = vmatprep.subr.bf16.mxu0 0
        %772 = vmatpush1.bf16.msra.mxu0 %v737
        %773 = vmatprep.subr.bf16.mxu0 0
        %774 = vmatpush1.bf16.msra.mxu0 %v738
        %775 = vmatprep.subr.bf16.mxu0 0
        %776 = vmatpush1.bf16.msra.mxu0 %v739
        %777 = vmatprep.subr.bf16.mxu0 0
        %778 = vmatpush1.bf16.msra.mxu0 %v740
        %779 = vmatprep.subr.bf16.mxu0 0
        %780 = vmatpush1.bf16.msra.mxu0 %v741
        %781 = vmatprep.mubr.bf16.mxu0 %v746
        %782 = vmatmul.mubr.bf16.gmra.mrb[0].mxu0 %v745
        %v783 = vpop.f32.mrb[0].mxu0
        %v784 = vadd.f32 0.0, %v783
        %v785 = vpop.f32.mrb[0].mxu0
        %v786 = vpop.f32.mrb[0].mxu0
        %v787 = vpop.f32.mrb[0].mxu0
        %788 = vdwg.mxu0
        %v789 = vlaneseq
        %v790 = vshrl.u32 %v789, 7
        %v791 = vsub.s32 5, %v790
        %v792 = vrot.slane %v326, %v791
        %v793 = vmul.f32 %v784, %v792
        %v794 = vadd.f32 %v716, %v793
        %v795 = vld [vmem:[%s299] sm:$0xff]
        %v796 = vadd.f32 %v795, %v794
        %797 = vst [vmem:[%s299] sm:$0xff] %v796
        %s798 = sand.u32 %s161, 1
        %s799 = scalar_lea.sflag [#allocation4], %s798
        %s800 = sand.u32 %s161, 1
        %s801 = smul.addr %s800, 8
        %s802 = scalar_lea.vmem [#allocation7], %s801
        // Predicated region
        $region49: #{tpu_custom_call.1} parent=35 // pred_check
          %p803 = pneg %p171
        $region50: #{tpu_custom_call.1} parent=35 // pred_check_branch
          %805 = sbr.rel (%p803) target = $region52
        $region51: #{tpu_custom_call.1} parent=35 // pred_region
          %s807 = ssub.s32 128, 128
          %808 = vsyncadd %s799, %s807
          %s809 = smul.addr %s27, 3
          %s810 = sadd.s32 %s28, %s809
          %s811 = smul.addr %s810, 128
          %s812 = scalar_lea.hbm %s4, %s811
          %s814 = sshll.u32 %s802, 4
          %s815 = int_to_ptr.vmem [resolvable:$true] %s814
          %817 = dma.vmem_to_hbm [thread:$0]  %s815, 128, %s812, %s799
        $region52: #{tpu_custom_call.1} parent=35 // pred_fallthru
          _
      $region36: #{tpu_custom_call.1} parent=5 // pred_fallthru
        _
      %p818 = scmp.le.s32.totalorder 2, %s17
      // Predicated region
      $region53: #{tpu_custom_call.1} parent=5 // pred_check
        %p819 = pneg %p818
      $region54: #{tpu_custom_call.1} parent=5 // pred_check_branch
        %821 = sbr.rel (%p819) target = $region56
      $region55: #{tpu_custom_call.1} parent=5 // pred_region
        %s822 = ssub.s32 %s17, 2
        // Predicated region
        $region57: #{tpu_custom_call.1} parent=55 // pred_check
          %p823 = pneg %p177
        $region58: #{tpu_custom_call.1} parent=55 // pred_check_branch
          %825 = sbr.rel (%p823) target = $region60
        $region59: #{tpu_custom_call.1} parent=55 // pred_region
          %s826 = sand.u32 %s162, 1
          %s827 = scalar_lea.sflag [#allocation4], %s826
          %s828 = sand.u32 %s162, 1
          %s829 = smul.addr %s828, 8
          %s830 = scalar_lea.vmem [#allocation7], %s829
          %831 = dma.done %s827, 128
        $region60: #{tpu_custom_call.1} parent=55 // pred_fallthru
          _
      $region56: #{tpu_custom_call.1} parent=5 // pred_fallthru
        _
    $region6: #{tpu_custom_call.1} parent=1 // loop_footer
      %s21 = sadd.s32 1, %s17
    $region7: #{tpu_custom_call.1} parent=1 // loop_footer_branch
      %16 = sbr.rel target = $region3
    $region8: #{tpu_custom_call.1} parent=1 // loop_exit
      _
    %832 = vsyncpa [#allocation3], 1
    %s833 = scalar_lea.sflag [#allocation3], 1
    %834 = vsyncpa %s833, 1
    %835 = vsyncpa [#allocation6], 1
    %s836 = scalar_lea.sflag [#allocation6], 1
    %837 = vsyncpa %s836, 1
    %838 = vsyncpa [#allocation4], 1
    %s839 = scalar_lea.sflag [#allocation4], 1
    %840 = vsyncpa %s839, 1

</llo_original>
